<compile_context>
chip_gen: v5e
topology: v5e:2x2
jax: 0.10.0
libtpu: 0.0.40
codegen_flags: <defaults>
</compile_context>

<pallas_src>
import jax
import jax.numpy as jnp
from jax import lax
from jax.experimental import pallas as pl
from jax.experimental.pallas import tpu as pltpu


def _round_up(x, m):
    return ((x + m - 1) // m) * m


def _round_down(x, m):
    return (x // m) * m


def _vmem_limit_bytes():
    """Per-generation scoped-VMEM budget (~70% of physical per-TC VMEM).

    v7x  (64 MiB/TC)   -> ~44 MiB  (stay well under 64 MiB, leave headroom)
    v5e/v6e (128 MiB)  -> ~90 MiB  (well above the 32 MiB scoped default)
    """
    cap = 64 * 1024 * 1024  # conservative fallback = smallest generation (v7x per-TC)
    try:
        info = pltpu.get_tpu_info()
        cap = int(getattr(info, "vmem_capacity_bytes", cap) or cap)
    except Exception:
        pass
    return max(32 * 1024 * 1024, min(int(cap * 0.7), 100 * 1024 * 1024))


def mlp_kernel(x_ref, w1_ref, b1_ref, w2_ref, b2_ref, w3_ref, b3_ref, o_ref):
    # Layer 1 — the only matmul with real arithmetic: (TM, D) bf16 @ (D, 16) bf16 -> f32
    # on the MXU.
    h1 = jnp.dot(x_ref[...], w1_ref[...], preferred_element_type=jnp.float32)
    h1 = jnp.maximum(h1 + b1_ref[...], 0.0)                       # (TM, 16) f32

    # Layer 2 — tiny (8, 16) weight, contracted against h1's feature dim so the result
    # comes out batch-on-lanes (8, TM); no materialized h1.T in the kernel.  Any relayout
    # Mosaic emits here is hidden under the x DMA (kernel is HBM-bound).
    h2 = lax.dot_general(
        w2_ref[...], h1,
        dimension_numbers=(((1,), (1,)), ((), ())),
        preferred_element_type=jnp.float32,
    )
    h2 = jnp.maximum(h2 + b2_ref[...], 0.0)                       # (8, TM), b2 is (8, 1)

    # Layer 3 (out_features = 1) — VPU/XLU weighted sum over the 8 sublanes -> lane-dense
    # (1, TM) row, so the store is an unmasked full-lane vst.
    y = jnp.sum(h2 * w3_ref[...], axis=0, keepdims=True) + b3_ref[...]
    o_ref[...] = y.astype(o_ref.dtype)


def my_dnn_forward(x, packed_params):
    """Forward pass of My_DNNModel.  x: (B, D) -> (B,) float32."""
    w1t, b1r, w2, b2c, w3c, b3s = packed_params
    B, D = x.shape

    # bf16 on the HBM->VMEM path (numerics: bf16 operands, f32 accumulation on the MXU).
    # Ideally the caller supplies x already in bf16 so this cast fuses away upstream.
    if x.dtype != jnp.bfloat16:
        x = x.astype(jnp.bfloat16)

    vmem_limit = _vmem_limit_bytes()

    # Adaptive batch tile: double-buffered bf16 x tile (TM x round_up(D,128)) gets ~half
    # the VMEM budget; weights / activations / output are tiny by comparison.
    d_pad = _round_up(D, 128)
    x_budget = vmem_limit // 2
    tm_fit = _round_down(x_budget // (2 * 2 * d_pad), 128)        # 2 buffers * 2 B/elem
    TM = int(max(512, min(tm_fit, 8192)))                         # roofline plateau clamp

    # v7x megacore: ensure >= 2 grid steps for mid/large batches so both TensorCores get
    # work (no effect on single-TC v5e/v6e).
    if B > 1024:
        TM = min(TM, _round_up(pl.cdiv(B, 2), 128))

    if B <= TM:
        TM = B  # single full-extent tile; any B (incl. non-multiples of 8/128) is legal

    grid = (pl.cdiv(B, TM),)

    resident = lambda a: pl.BlockSpec(a.shape, lambda i: (0, 0))  # weights stay in VMEM

    flops = 2 * B * (D * 16 + 16 * 8 + 8)
    bytes_accessed = int(2 * B * D + 2 * w1t.size + 4 * (B + b1r.size + w2.size
                                                         + b2c.size + w3c.size + b3s.size))

    out = pl.pallas_call(
        mlp_kernel,
        out_shape=jax.ShapeDtypeStruct((1, B), jnp.float32),
        grid_spec=pl.GridSpec(
            grid=grid,
            in_specs=[
                pl.BlockSpec((TM, D), lambda i: (i, 0)),          # x tile marches over batch
                resident(w1t), resident(b1r),
                resident(w2), resident(b2c),
                resident(w3c), resident(b3s),
            ],
            out_specs=pl.BlockSpec((1, TM), lambda i: (0, i)),    # lane-dense output slab
        ),
        compiler_params=pltpu.CompilerParams(
            dimension_semantics=("parallel",),
            vmem_limit_bytes=vmem_limit,
        ),
        cost_estimate=pl.CostEstimate(
            flops=flops, transcendentals=0, bytes_accessed=bytes_accessed),
    )(x, w1t, b1r, w2, b2c, w3c, b3s)

    return out[0]  # (1, B) -> (B,)  == squeeze(1) of the PyTorch (B, 1) output


def init_params(input_dim, key):
    """Deterministic parameters in PyTorch nn.Linear layout: W (out, in), b (out,)."""
    ks = jax.random.split(key, 6)

    def lin(kw, kb, fan_in, fan_out):
        bound = 1.0 / jnp.sqrt(fan_in)
        w = jax.random.uniform(kw, (fan_out, fan_in), jnp.float32, -bound, bound)
        b = jax.random.uniform(kb, (fan_out,), jnp.float32, -bound, bound)
        return w, b

    w1, b1 = lin(ks[0], ks[1], input_dim, 16)
    w2, b2 = lin(ks[2], ks[3], 16, 8)
    w3, b3 = lin(ks[4], ks[5], 8, 1)
    return (w1, b1, w2, b2, w3, b3)


def pack_params(params):
    """One-time layout glue (kept off the per-call critical path)."""
    w1, b1, w2, b2, w3, b3 = params
    return (
        w1.T.astype(jnp.bfloat16),  # (D, 16) bf16  x @ W1 on the MXU
        b1.reshape(1, -1),          # (1, 16) f32
        w2,                         # (8, 16) f32   used as-is via dot_general contraction
        b2.reshape(-1, 1),          # (8, 1)  f32   column bias for batch-on-lanes layout
        w3.T,                       # (8, 1)  f32   weights for the sublane weighted sum
        b3.reshape(1, 1),           # (1, 1)  f32
    )


if __name__ == "__main__":
    key = jax.random.PRNGKey(0)
    k_x, k_p, k_x2 = jax.random.split(key, 3)

    B, D = 8, 32  # small shapes consistent with the module (batch, input_dim)
    x = jax.random.normal(k_x, (B, D), jnp.float32)
    params = init_params(D, k_p)
    packed = pack_params(params)

    def reference(xv, ps):
        w1, b1, w2, b2, w3, b3 = ps
        # Match the kernel's bf16 layer-1 operands (f32 accumulation on the MXU).
        xq = xv.astype(jnp.bfloat16).astype(jnp.float32)
        w1q = w1.astype(jnp.bfloat16).astype(jnp.float32)
        h = jnp.maximum(xq @ w1q.T + b1, 0.0)
        h = jnp.maximum(h @ w2.T + b2, 0.0)
        return (h @ w3.T + b3)[:, 0]

    y = my_dnn_forward(x, packed)
    jax.block_until_ready(y)
    ref = reference(x, params)
    assert y.shape == (B,)
    assert jnp.allclose(y, ref, atol=1e-4, rtol=1e-4)

    # Exercise the multi-tile + ragged-last-tile + megacore path (still tiny: ~190 KiB x).
    B2 = 1500
    x2 = jax.random.normal(k_x2, (B2, D), jnp.float32)
    y2 = my_dnn_forward(x2, packed)
    jax.block_until_ready(y2)
    ref2 = reference(x2, params)
    assert y2.shape == (B2,)
    assert jnp.allclose(y2, ref2, atol=1e-4, rtol=1e-4)

    print("KERNEL_OK")
</pallas_src>

<mosaic_0001>
module attributes {stable_mosaic.version = 11 : i64} {
  func.func @mlp_kernel(%arg0: i32, %arg1: memref<8x32xbf16, #tpu.memory_space<vmem>>, %arg2: memref<32x16xbf16, #tpu.memory_space<vmem>>, %arg3: memref<1x16xf32, #tpu.memory_space<vmem>>, %arg4: memref<8x16xf32, #tpu.memory_space<vmem>>, %arg5: memref<8x1xf32, #tpu.memory_space<vmem>>, %arg6: memref<8x1xf32, #tpu.memory_space<vmem>>, %arg7: memref<1x1xf32, #tpu.memory_space<vmem>>, %arg8: memref<1x8xf32, #tpu.memory_space<vmem>>) attributes {dimension_semantics = [#tpu.dimension_semantics<parallel>], iteration_bounds = array<i64: 1>, scalar_prefetch = 0 : i64, scratch_operands = 0 : i64, tpu.core_type = #tpu.core_type<tc>, window_params = [{transform_indices = @transform_0, window_bounds = array<i64: 8, 32>}, {pipeline_mode = #tpu.pipeline_mode<synchronous>, transform_indices = @transform_1, window_bounds = array<i64: 32, 16>}, {pipeline_mode = #tpu.pipeline_mode<synchronous>, transform_indices = @transform_2, window_bounds = array<i64: 1, 16>}, {pipeline_mode = #tpu.pipeline_mode<synchronous>, transform_indices = @transform_3, window_bounds = array<i64: 8, 16>}, {pipeline_mode = #tpu.pipeline_mode<synchronous>, transform_indices = @transform_4, window_bounds = array<i64: 8, 1>}, {pipeline_mode = #tpu.pipeline_mode<synchronous>, transform_indices = @transform_5, window_bounds = array<i64: 8, 1>}, {pipeline_mode = #tpu.pipeline_mode<synchronous>, transform_indices = @transform_6, window_bounds = array<i64: 1, 1>}, {transform_indices = @transform_7, window_bounds = array<i64: 1, 8>}]} {
    %c0 = arith.constant 0 : index
    %c0_0 = arith.constant 0 : index
    %0 = vector.load %arg1[%c0, %c0_0] : memref<8x32xbf16, #tpu.memory_space<vmem>>, vector<8x32xbf16>
    %c0_1 = arith.constant 0 : index
    %c0_2 = arith.constant 0 : index
    %1 = vector.load %arg2[%c0_1, %c0_2] : memref<32x16xbf16, #tpu.memory_space<vmem>>, vector<32x16xbf16>
    %cst = arith.constant dense<0.000000e+00> : vector<8x16xf32>
    %2 = tpu.matmul %0, %1, %cst {dimension_numbers = #tpu.dot_dimension_numbers<[1], [0], [0], [1], [0, 0, 1, 1], [], []>} : vector<8x32xbf16>, vector<32x16xbf16>, vector<8x16xf32> -> vector<8x16xf32>
    %c0_3 = arith.constant 0 : index
    %c0_4 = arith.constant 0 : index
    %3 = vector.load %arg3[%c0_3, %c0_4] : memref<1x16xf32, #tpu.memory_space<vmem>>, vector<1x16xf32>
    %4 = vector.broadcast %3 : vector<1x16xf32> to vector<8x16xf32>
    %5 = arith.addf %2, %4 : vector<8x16xf32>
    %cst_5 = arith.constant 0.000000e+00 : f32
    %6 = vector.broadcast %cst_5 : f32 to vector<8x16xf32>
    %7 = arith.maximumf %5, %6 : vector<8x16xf32>
    %c0_6 = arith.constant 0 : index
    %c0_7 = arith.constant 0 : index
    %8 = vector.load %arg4[%c0_6, %c0_7] : memref<8x16xf32, #tpu.memory_space<vmem>>, vector<8x16xf32>
    %cst_8 = arith.constant dense<0.000000e+00> : vector<8x8xf32>
    %9 = tpu.matmul %8, %7, %cst_8 {dimension_numbers = #tpu.dot_dimension_numbers<[1], [1], [0], [0], [0, 0, 1, 0], [], []>} : vector<8x16xf32>, vector<8x16xf32>, vector<8x8xf32> -> vector<8x8xf32>
    %c0_9 = arith.constant 0 : index
    %c0_10 = arith.constant 0 : index
    %10 = vector.load %arg5[%c0_9, %c0_10] : memref<8x1xf32, #tpu.memory_space<vmem>>, vector<8x1xf32>
    %11 = vector.broadcast %10 : vector<8x1xf32> to vector<8x8xf32>
    %12 = arith.addf %9, %11 : vector<8x8xf32>
    %cst_11 = arith.constant 0.000000e+00 : f32
    %13 = vector.broadcast %cst_11 : f32 to vector<8x8xf32>
    %14 = arith.maximumf %12, %13 : vector<8x8xf32>
    %c0_12 = arith.constant 0 : index
    %c0_13 = arith.constant 0 : index
    %15 = vector.load %arg6[%c0_12, %c0_13] : memref<8x1xf32, #tpu.memory_space<vmem>>, vector<8x1xf32>
    %16 = vector.broadcast %15 : vector<8x1xf32> to vector<8x8xf32>
    %17 = arith.mulf %14, %16 : vector<8x8xf32>
    %cst_14 = arith.constant dense<0.000000e+00> : vector<8xf32>
    %18 = vector.multi_reduction <add>, %17, %cst_14 [0] : vector<8x8xf32> to vector<8xf32>
    %19 = vector.shape_cast %18 : vector<8xf32> to vector<1x8xf32>
    %c0_15 = arith.constant 0 : index
    %c0_16 = arith.constant 0 : index
    %20 = vector.load %arg7[%c0_15, %c0_16] : memref<1x1xf32, #tpu.memory_space<vmem>>, vector<1x1xf32>
    %21 = vector.broadcast %20 : vector<1x1xf32> to vector<1x8xf32>
    %22 = arith.addf %19, %21 : vector<1x8xf32>
    %c0_17 = arith.constant 0 : index
    %c0_18 = arith.constant 0 : index
    %23 = vector.load %arg8[%c0_17, %c0_18] : memref<1x8xf32, #tpu.memory_space<vmem>>, vector<1x8xf32>
    tpu.vector_store %arg8[%c0_17, %c0_18], %22 {strides = array<i32>} : memref<1x8xf32, #tpu.memory_space<vmem>>, vector<1x8xf32>,
    return
  }
  func.func @transform_0(%arg0: i32) -> (i32, i32) {
    %c0_i32 = arith.constant 0 : i32
    %c0_i32_0 = arith.constant 0 : i32
    return %arg0, %c0_i32 : i32, i32
  }
  func.func @transform_1(%arg0: i32) -> (i32, i32) {
    %c0_i32 = arith.constant 0 : i32
    %c0_i32_0 = arith.constant 0 : i32
    %c0_i32_1 = arith.constant 0 : i32
    return %c0_i32, %c0_i32_0 : i32, i32
  }
  func.func @transform_2(%arg0: i32) -> (i32, i32) {
    %c0_i32 = arith.constant 0 : i32
    %c0_i32_0 = arith.constant 0 : i32
    %c0_i32_1 = arith.constant 0 : i32
    return %c0_i32, %c0_i32_0 : i32, i32
  }
  func.func @transform_3(%arg0: i32) -> (i32, i32) {
    %c0_i32 = arith.constant 0 : i32
    %c0_i32_0 = arith.constant 0 : i32
    %c0_i32_1 = arith.constant 0 : i32
    return %c0_i32, %c0_i32_0 : i32, i32
  }
  func.func @transform_4(%arg0: i32) -> (i32, i32) {
    %c0_i32 = arith.constant 0 : i32
    %c0_i32_0 = arith.constant 0 : i32
    %c0_i32_1 = arith.constant 0 : i32
    return %c0_i32, %c0_i32_0 : i32, i32
  }
  func.func @transform_5(%arg0: i32) -> (i32, i32) {
    %c0_i32 = arith.constant 0 : i32
    %c0_i32_0 = arith.constant 0 : i32
    %c0_i32_1 = arith.constant 0 : i32
    return %c0_i32, %c0_i32_0 : i32, i32
  }
  func.func @transform_6(%arg0: i32) -> (i32, i32) {
    %c0_i32 = arith.constant 0 : i32
    %c0_i32_0 = arith.constant 0 : i32
    %c0_i32_1 = arith.constant 0 : i32
    return %c0_i32, %c0_i32_0 : i32, i32
  }
  func.func @transform_7(%arg0: i32) -> (i32, i32) {
    %c0_i32 = arith.constant 0 : i32
    %c0_i32_0 = arith.constant 0 : i32
    return %c0_i32, %arg0 : i32, i32
  }
}

</mosaic_0001>

<llo_original>
// kernel: tpu_custom_call.1
$region0: #{tpu_custom_call.1}
  #allocation0 [shape = 'u32[]', space=smem, size = 0x4, offset = 0x4, fixed_abs, tag = 'smem constant byte address 0x4 - core index']
  #allocation1 [shape = 'u32[72,128]{1,0:T(1,128)}', space=vmem, size = 0x9000, scoped, tag = 'internal scratch']
  #allocation2 [shape = 'f32[1,1]{1,0:T(1,128)S(1)}', space=vmem, size = 0x200, scoped, tag = 'scoped memory for tpu_custom_call.1']
  %s0 = inlined_call_operand.vmem [shape: bf16[8,32], index: 0, kind: input, shape index: {}]
  %s1 = inlined_call_operand.vmem [shape: bf16[32,16], index: 1, kind: input, shape index: {}]
  %s2 = inlined_call_operand.vmem [shape: f32[1,16], index: 2, kind: input, shape index: {}]
  %s3 = inlined_call_operand.vmem [shape: f32[8,16], index: 3, kind: input, shape index: {}]
  %s4 = inlined_call_operand.vmem [shape: f32[8,1], index: 4, kind: input, shape index: {}]
  %s5 = inlined_call_operand.vmem [shape: f32[8,1], index: 5, kind: input, shape index: {}]
  %s6 = inlined_call_operand.<no memory space> [shape: f32[1,1], index: 6, kind: input, shape index: {}]
  %s7 = inlined_call_operand.hbm [shape: f32[1,8], index: 7, kind: output, shape index: {}]
  %s8 = sld [smem:[#allocation0]]
  $region38: #{tpu_custom_call.1} parent=0
    _
  %s10 = ssub.s32 1, %s8
  %s11 = scalar_select 0, %s10, %s8
  %v12 = vstv %s6
  %13 = vst [vmem:[#allocation2] sm:$0x1] %v12
  $region1: #{tpu_custom_call.1} parent=0
    #allocation3 [shape = 'u8[512]{0}', space=vmem, size = 0x400, scoped, tag = 'output window, operand 0, single buffered']
    #allocation4 [shape = 's32[1]{0}', space=sflag, size = 0x4, scoped, tag = 'scoped memory for tpu_custom_call.1']
    %14 = vsyncpa [#allocation4], 0
    // Predicated region
    $region2: #{tpu_custom_call.1} parent=1 // pred_check
      _
    $region3: #{tpu_custom_call.1} parent=1 // pred_check_branch
      %16 = sbr.rel (0) target = $region5
    $region4: #{tpu_custom_call.1} parent=1 // pred_region
      _
    $region5: #{tpu_custom_call.1} parent=1 // pred_fallthru
      _
    // Predicated region
    $region6: #{tpu_custom_call.1} parent=1 // pred_check
      _
    $region7: #{tpu_custom_call.1} parent=1 // pred_check_branch
      %18 = sbr.rel (0) target = $region9
    $region8: #{tpu_custom_call.1} parent=1 // pred_region
      _
    $region9: #{tpu_custom_call.1} parent=1 // pred_fallthru
      _
    // Predicated region
    $region10: #{tpu_custom_call.1} parent=1 // pred_check
      _
    $region11: #{tpu_custom_call.1} parent=1 // pred_check_branch
      %20 = sbr.rel (0) target = $region13
    $region12: #{tpu_custom_call.1} parent=1 // pred_region
      _
    $region13: #{tpu_custom_call.1} parent=1 // pred_fallthru
      _
    // Predicated region
    $region14: #{tpu_custom_call.1} parent=1 // pred_check
      _
    $region15: #{tpu_custom_call.1} parent=1 // pred_check_branch
      %22 = sbr.rel (0) target = $region17
    $region16: #{tpu_custom_call.1} parent=1 // pred_region
      _
    $region17: #{tpu_custom_call.1} parent=1 // pred_fallthru
      _
    // Predicated region
    $region18: #{tpu_custom_call.1} parent=1 // pred_check
      _
    $region19: #{tpu_custom_call.1} parent=1 // pred_check_branch
      %24 = sbr.rel (0) target = $region21
    $region20: #{tpu_custom_call.1} parent=1 // pred_region
      _
    $region21: #{tpu_custom_call.1} parent=1 // pred_fallthru
      _
    // Predicated region
    $region22: #{tpu_custom_call.1} parent=1 // pred_check
      _
    $region23: #{tpu_custom_call.1} parent=1 // pred_check_branch
      %26 = sbr.rel (0) target = $region25
    $region24: #{tpu_custom_call.1} parent=1 // pred_region
      _
    $region25: #{tpu_custom_call.1} parent=1 // pred_fallthru
      _
    // Predicated region
    $region26: #{tpu_custom_call.1} parent=1 // pred_check
      _
    $region27: #{tpu_custom_call.1} parent=1 // pred_check_branch
      %28 = sbr.rel (0) target = $region29
    $region28: #{tpu_custom_call.1} parent=1 // pred_region
      _
    $region29: #{tpu_custom_call.1} parent=1 // pred_fallthru
      _
    %v30 = vld [vmem:[%s0] sm:$0xf]
    %v31 = vld [vmem:[%s1] sm:$0xf]
    %v32 = vld [vmem:[%s1 + $0x4] sm:$0xf]
    %v33 = vld [vmem:[%s1 + $0x8] sm:$0xf]
    %v34 = vld [vmem:[%s1 + $0xc] sm:$0xf]
    %v35 = vld [vmem:[%s2] sm:$0x1]
    %v37 = vperm.slane %v35, 0
    %v43 = vunpack.c.l.b16 %v31
    %v44 = vunpack.c.l.b16 %v32
    %v45 = vunpack.c.l.b16 %v33
    %v46 = vunpack.c.l.b16 %v34
    %v47 = vpack.c.b16 %v44, %v43
    %v48 = vpack.c.b16 %v46, %v45
    %vm51 = vcmask 261120
    %v53 = vsel %vm51, %v30, 0
    %55 = vmatpush.bf16.msra.mxu0 0
    %56 = vmatpush.bf16.msra.mxu0 0
    %57 = vmatpush.bf16.msra.mxu0 0
    %58 = vmatpush.bf16.msra.mxu0 0
    %59 = vmatpush.bf16.msra.mxu0 0
    %60 = vmatpush.bf16.msra.mxu0 0
    %61 = vmatpush.bf16.msra.mxu0 %v48
    %62 = vmatpush.bf16.msra.mxu0 %v47
    %63 = vmatmul.bf16.gmra.mxu0 %v53
    %v64 = vpop.f32.mrf.mxu0
    %v65 = vadd.f32 %v37, %v64
    %v66 = vpop.f32.mrf.mxu0
    %67 = vdwg.mxu0
    %v68 = vmax.f32 %v65, 0.0
    %v69 = vld [vmem:[%s3] sm:$0xff]
    %v70 = vld [vmem:[%s4] sm:$0xff]
    %72 = vset.pattern.permute.xlu0 0
    %73 = vperm.xlu0 %72, %v70
    %v74 = vpop.permute.xlu0 %73
    %vm76 = vcmask 130048
    %v78 = vsel %vm76, %v69, 0
    %v81 = vsel %vm76, %v68, 0
    %83 = vmatpush.xpose.msra.mxu0 0.0
    %84 = vmatpush.xpose.msra.mxu0 0.0
    %85 = vmatpush.xpose.msra.mxu0 0.0
    %86 = vmatpush.xpose.msra.mxu0 0.0
    %87 = vmatpush.xpose.msra.mxu0 0.0
    %88 = vmatpush.xpose.msra.mxu0 0.0
    %89 = vmatpush.xpose.msra.mxu0 0.0
    %90 = vmatpush.xpose.msra.mxu0 0.0
    %91 = vmatpush.xpose.msra.mxu0 0.0
    %92 = vmatpush.xpose.msra.mxu0 0.0
    %93 = vmatpush.xpose.msra.mxu0 0.0
    %94 = vmatpush.xpose.msra.mxu0 0.0
    %95 = vmatpush.xpose.msra.mxu0 0.0
    %96 = vmatpush.xpose.msra.mxu0 0.0
    %97 = vmatpush.xpose.msra.mxu0 0.0
    %98 = vmatpush.xpose.msra.mxu0 %v81
    %99 = vmatmul.f32.gmra.mxu0 %v78
    %v100 = vpop.f32.mrf.mxu0
    %v101 = vadd.f32 %v74, %v100
    %102 = vdwg.mxu0
    %v103 = vmax.f32 %v101, 0.0
    %v104 = vld [vmem:[%s5] sm:$0xff]
    %106 = vset.pattern.permute.xlu0 0
    %107 = vperm.xlu0 %106, %v104
    %v108 = vpop.permute.xlu0 %107
    %v110 = vmul.f32 %v103, %v108
    %vm111 = vcmask 64512
    %v112 = vsel %vm111, %v110, 0.0
    %v113 = vrot.slane %v112, 4
    %v114 = vadd.f32 %v112, %v113
    %v115 = vrot.slane %v114, 2
    %v116 = vadd.f32 %v114, %v115
    %v117 = vrot.slane %v116, 1
    %v118 = vadd.f32 %v116, %v117
    %v119 = vld [vmem:[#allocation2] sm:$0x1]
    %121 = vset.pattern.permute.xlu0 0
    %122 = vperm.xlu0 %121, %v119
    %v123 = vpop.permute.xlu0 %122
    %v125 = vperm.slane %v123, 0
    %v126 = vadd.f32 %v118, %v125
    %vm127 = vcmask 57344
    %128 = vst.msk [vmem:[#allocation3] sm:$0x1] %vm127, %v126
    // Predicated region
    $region30: #{tpu_custom_call.1} parent=1 // pred_check
      _
    $region31: #{tpu_custom_call.1} parent=1 // pred_check_branch
      %130 = sbr.rel (0) target = $region33
    $region32: #{tpu_custom_call.1} parent=1 // pred_region
      %132 = vsyncadd [#allocation4], 0
      %s134 = sshll.u32 [#allocation3], 4
      %s135 = int_to_ptr.vmem [resolvable:$true] %s134
      %s136 = sshll.u32 %s7, 4
      %s137 = int_to_ptr.hbm [resolvable:$true] %s136
      %139 = dma.vmem_to_hbm [thread:$0]  %s135, 16, %s137, [#allocation4]
    $region33: #{tpu_custom_call.1} parent=1 // pred_fallthru
      _
    // Predicated region
    $region34: #{tpu_custom_call.1} parent=1 // pred_check
      _
    $region35: #{tpu_custom_call.1} parent=1 // pred_check_branch
      %141 = sbr.rel (0) target = $region37
    $region36: #{tpu_custom_call.1} parent=1 // pred_region
      %143 = dma.done [#allocation4], 16
    $region37: #{tpu_custom_call.1} parent=1 // pred_fallthru
      _
    %144 = vsyncpa [#allocation4], 1

</llo_original>
